<compile_context>
chip_gen: v5e
topology: v5e:2x2
jax: 0.10.0
libtpu: 0.0.40
codegen_flags: <defaults>
</compile_context>

<pallas_src>
import jax
import jax.numpy as jnp
from jax.experimental import pallas as pl
from jax.experimental.pallas import tpu as pltpu

F_IN, F_HID, F_OUT = 4, 4, 1


def mlp_kernel(xt_ref, p_ref, o_ref):
    # xt_ref: [F_IN, B]   features on sublanes, batch on lanes
    # p_ref:  [8, 8]      packed params (PyTorch layouts):
    #            p[0:4, 0:4] = fc1.weight  (out x in)
    #            p[0:4, 4:5] = fc1.bias    (as a column)
    #            p[4:5, 0:4] = fc2.weight  (row)
    #            p[4:5, 4:5] = fc2.bias
    # o_ref:  [F_OUT, B]  batch on lanes (lane-dense as B grows)
    xt = xt_ref[...]
    p = p_ref[...]

    # Hidden layer: h[j, b] = b1[j] + sum_k w1[j, k] * x[k, b]  (unrolled VPU FMAs)
    h = p[0:F_HID, F_IN:F_IN + 1]                           # [4, 1] bias column
    for k in range(F_IN):
        h = h + p[0:F_HID, k:k + 1] * xt[k:k + 1, :]        # [4,1] * [1,B] -> [4,B]
    h = jnp.maximum(h, 0.0)                                 # ReLU

    # Output layer: y[0, b] = b2 + sum_j w2[0, j] * h[j, b]
    y = p[F_HID:F_HID + 1, F_HID:F_HID + 1]                 # [1, 1] bias
    for j in range(F_HID):
        y = y + p[F_HID:F_HID + 1, j:j + 1] * h[j:j + 1, :]  # [1,1] * [1,B] -> [1,B]

    o_ref[...] = y.astype(o_ref.dtype)


def pack_params(w1, b1, w2, b2):
    """Pack PyTorch-layout params (fc1.weight [4,4], fc1.bias [4],
    fc2.weight [1,4], fc2.bias [1]) into one (8, 8) f32 block -> single DMA,
    all pieces inside one (8,128) sublane/lane tile."""
    p = jnp.zeros((8, 8), jnp.float32)
    p = p.at[0:F_HID, 0:F_IN].set(w1)
    p = p.at[0:F_HID, F_IN].set(b1)
    p = p.at[F_HID, 0:F_HID].set(w2[0])
    p = p.at[F_HID, F_HID].set(b2[0])
    return p


@jax.jit
def net_forward(x, packed_params):
    """x: [B, 4] float32 -> [B, 1] float32 (same semantics as Net.forward)."""
    B = x.shape[0]
    xt = x.T  # [F_IN, B]: batch on the lane axis (wrapper-side layout plumbing)
    # TODO(synk): for large B, tile the batch: grid=(pl.cdiv(B, TILE_B),) with a
    # "parallel" dimension_semantics axis, TILE_B sized against v7x's 64 MiB VMEM.
    yt = pl.pallas_call(
        mlp_kernel,
        out_shape=jax.ShapeDtypeStruct((F_OUT, B), jnp.float32),
        in_specs=[
            pl.BlockSpec(memory_space=pltpu.MemorySpace.VMEM),
            pl.BlockSpec(memory_space=pltpu.MemorySpace.VMEM),
        ],
        out_specs=pl.BlockSpec(memory_space=pltpu.MemorySpace.VMEM),
    )(xt, packed_params)
    return yt.reshape(B, F_OUT)  # (1, B) -> (B, 1); dim-0 is size 1 so this is free


def init_params(key):
    """PyTorch nn.Linear default init (U(-1/sqrt(fan_in), 1/sqrt(fan_in))),
    PyTorch layouts: fc1.weight (4,4), fc1.bias (4,), fc2.weight (1,4), fc2.bias (1,)."""
    k1, k2, k3, k4 = jax.random.split(key, 4)
    bound1 = 1.0 / jnp.sqrt(F_IN)
    bound2 = 1.0 / jnp.sqrt(F_HID)
    w1 = jax.random.uniform(k1, (F_HID, F_IN), jnp.float32, -bound1, bound1)
    b1 = jax.random.uniform(k2, (F_HID,), jnp.float32, -bound1, bound1)
    w2 = jax.random.uniform(k3, (F_OUT, F_HID), jnp.float32, -bound2, bound2)
    b2 = jax.random.uniform(k4, (F_OUT,), jnp.float32, -bound2, bound2)
    return w1, b1, w2, b2


if __name__ == "__main__":
    key = jax.random.PRNGKey(0)
    kx, kp = jax.random.split(key)
    B = 8
    x = jax.random.normal(kx, (B, F_IN), jnp.float32)
    w1, b1, w2, b2 = init_params(kp)
    params = pack_params(w1, b1, w2, b2)

    out = net_forward(x, params)
    out = jax.block_until_ready(out)

    # Reference in plain JAX (HIGHEST precision so it matches the exact-f32 VPU-FMA kernel).
    hi = jax.lax.Precision.HIGHEST
    h_ref = jnp.maximum(jnp.dot(x, w1.T, precision=hi) + b1, 0.0)
    ref = jnp.dot(h_ref, w2.T, precision=hi) + b2

    assert out.shape == (B, F_OUT)
    assert jnp.allclose(out, ref, atol=1e-5, rtol=1e-5)

    print("KERNEL_OK")
</pallas_src>

<mosaic_0001>
module attributes {stable_mosaic.version = 11 : i64} {
  func.func @mlp_kernel(%arg0: memref<4x8xf32, #tpu.memory_space<vmem>>, %arg1: memref<8x8xf32, #tpu.memory_space<vmem>>, %arg2: memref<1x8xf32, #tpu.memory_space<vmem>>) attributes {dimension_semantics = [], scalar_prefetch = 0 : i64, scratch_operands = 0 : i64, tpu.core_type = #tpu.core_type<tc>} {
    %c0 = arith.constant 0 : index
    %c0_0 = arith.constant 0 : index
    %0 = vector.load %arg0[%c0, %c0_0] : memref<4x8xf32, #tpu.memory_space<vmem>>, vector<4x8xf32>
    %c0_1 = arith.constant 0 : index
    %c0_2 = arith.constant 0 : index
    %1 = vector.load %arg1[%c0_1, %c0_2] : memref<8x8xf32, #tpu.memory_space<vmem>>, vector<8x8xf32>
    %2 = vector.extract_strided_slice %1 {offsets = [0, 4], sizes = [4, 1], strides = [1, 1]} : vector<8x8xf32> to vector<4x1xf32>
    %3 = vector.extract_strided_slice %1 {offsets = [0, 0], sizes = [4, 1], strides = [1, 1]} : vector<8x8xf32> to vector<4x1xf32>
    %4 = vector.extract_strided_slice %0 {offsets = [0, 0], sizes = [1, 8], strides = [1, 1]} : vector<4x8xf32> to vector<1x8xf32>
    %5 = vector.broadcast %3 : vector<4x1xf32> to vector<4x8xf32>
    %6 = vector.broadcast %4 : vector<1x8xf32> to vector<4x8xf32>
    %7 = arith.mulf %5, %6 : vector<4x8xf32>
    %8 = vector.broadcast %2 : vector<4x1xf32> to vector<4x8xf32>
    %9 = arith.addf %8, %7 : vector<4x8xf32>
    %10 = vector.extract_strided_slice %1 {offsets = [0, 1], sizes = [4, 1], strides = [1, 1]} : vector<8x8xf32> to vector<4x1xf32>
    %11 = vector.extract_strided_slice %0 {offsets = [1, 0], sizes = [1, 8], strides = [1, 1]} : vector<4x8xf32> to vector<1x8xf32>
    %12 = vector.broadcast %10 : vector<4x1xf32> to vector<4x8xf32>
    %13 = vector.broadcast %11 : vector<1x8xf32> to vector<4x8xf32>
    %14 = arith.mulf %12, %13 : vector<4x8xf32>
    %15 = arith.addf %9, %14 : vector<4x8xf32>
    %16 = vector.extract_strided_slice %1 {offsets = [0, 2], sizes = [4, 1], strides = [1, 1]} : vector<8x8xf32> to vector<4x1xf32>
    %17 = vector.extract_strided_slice %0 {offsets = [2, 0], sizes = [1, 8], strides = [1, 1]} : vector<4x8xf32> to vector<1x8xf32>
    %18 = vector.broadcast %16 : vector<4x1xf32> to vector<4x8xf32>
    %19 = vector.broadcast %17 : vector<1x8xf32> to vector<4x8xf32>
    %20 = arith.mulf %18, %19 : vector<4x8xf32>
    %21 = arith.addf %15, %20 : vector<4x8xf32>
    %22 = vector.extract_strided_slice %1 {offsets = [0, 3], sizes = [4, 1], strides = [1, 1]} : vector<8x8xf32> to vector<4x1xf32>
    %23 = vector.extract_strided_slice %0 {offsets = [3, 0], sizes = [1, 8], strides = [1, 1]} : vector<4x8xf32> to vector<1x8xf32>
    %24 = vector.broadcast %22 : vector<4x1xf32> to vector<4x8xf32>
    %25 = vector.broadcast %23 : vector<1x8xf32> to vector<4x8xf32>
    %26 = arith.mulf %24, %25 : vector<4x8xf32>
    %27 = arith.addf %21, %26 : vector<4x8xf32>
    %cst = arith.constant 0.000000e+00 : f32
    %28 = vector.broadcast %cst : f32 to vector<4x8xf32>
    %29 = arith.maximumf %27, %28 : vector<4x8xf32>
    %30 = vector.extract_strided_slice %1 {offsets = [4, 4], sizes = [1, 1], strides = [1, 1]} : vector<8x8xf32> to vector<1x1xf32>
    %31 = vector.extract_strided_slice %1 {offsets = [4, 0], sizes = [1, 1], strides = [1, 1]} : vector<8x8xf32> to vector<1x1xf32>
    %32 = vector.extract_strided_slice %29 {offsets = [0, 0], sizes = [1, 8], strides = [1, 1]} : vector<4x8xf32> to vector<1x8xf32>
    %33 = vector.broadcast %31 : vector<1x1xf32> to vector<1x8xf32>
    %34 = arith.mulf %33, %32 : vector<1x8xf32>
    %35 = vector.broadcast %30 : vector<1x1xf32> to vector<1x8xf32>
    %36 = arith.addf %35, %34 : vector<1x8xf32>
    %37 = vector.extract_strided_slice %1 {offsets = [4, 1], sizes = [1, 1], strides = [1, 1]} : vector<8x8xf32> to vector<1x1xf32>
    %38 = vector.extract_strided_slice %29 {offsets = [1, 0], sizes = [1, 8], strides = [1, 1]} : vector<4x8xf32> to vector<1x8xf32>
    %39 = vector.broadcast %37 : vector<1x1xf32> to vector<1x8xf32>
    %40 = arith.mulf %39, %38 : vector<1x8xf32>
    %41 = arith.addf %36, %40 : vector<1x8xf32>
    %42 = vector.extract_strided_slice %1 {offsets = [4, 2], sizes = [1, 1], strides = [1, 1]} : vector<8x8xf32> to vector<1x1xf32>
    %43 = vector.extract_strided_slice %29 {offsets = [2, 0], sizes = [1, 8], strides = [1, 1]} : vector<4x8xf32> to vector<1x8xf32>
    %44 = vector.broadcast %42 : vector<1x1xf32> to vector<1x8xf32>
    %45 = arith.mulf %44, %43 : vector<1x8xf32>
    %46 = arith.addf %41, %45 : vector<1x8xf32>
    %47 = vector.extract_strided_slice %1 {offsets = [4, 3], sizes = [1, 1], strides = [1, 1]} : vector<8x8xf32> to vector<1x1xf32>
    %48 = vector.extract_strided_slice %29 {offsets = [3, 0], sizes = [1, 8], strides = [1, 1]} : vector<4x8xf32> to vector<1x8xf32>
    %49 = vector.broadcast %47 : vector<1x1xf32> to vector<1x8xf32>
    %50 = arith.mulf %49, %48 : vector<1x8xf32>
    %51 = arith.addf %46, %50 : vector<1x8xf32>
    %c0_3 = arith.constant 0 : index
    %c0_4 = arith.constant 0 : index
    %52 = vector.load %arg2[%c0_3, %c0_4] : memref<1x8xf32, #tpu.memory_space<vmem>>, vector<1x8xf32>
    tpu.vector_store %arg2[%c0_3, %c0_4], %51 {strides = array<i32>} : memref<1x8xf32, #tpu.memory_space<vmem>>, vector<1x8xf32>,
    return
  }
}

</mosaic_0001>

<llo_original>
// kernel: net_forward.1
$region0: #{net_forward.1}
  #allocation0 [shape = 'u32[]', space=smem, size = 0x4, offset = 0x4, fixed_abs, tag = 'smem constant byte address 0x4 - core index']
  #allocation1 [shape = 'u32[72,128]{1,0:T(1,128)}', space=vmem, size = 0x9000, scoped, tag = 'internal scratch']
  %s0 = inlined_call_operand.hbm [shape: f32[4,8], index: 0, kind: input, shape index: {}]
  %s1 = inlined_call_operand.hbm [shape: f32[8,8], index: 1, kind: input, shape index: {}]
  %s2 = inlined_call_operand.hbm [shape: f32[1,8], index: 2, kind: output, shape index: {}]
  %s3 = sld [smem:[#allocation0]]
  $region26: #{net_forward.1} parent=0
    _
  %s5 = ssub.s32 1, %s3
  %s6 = scalar_select 0, %s5, %s3
  $region1: #{net_forward.1} parent=0
    #allocation2 [shape = 'u8[2048]{0}', space=vmem, size = 0x800, scoped, tag = 'input window, operand 0, single buffered']
    #allocation3 [shape = 's32[1]{0}', space=sflag, size = 0x4, scoped, tag = 'scoped memory for net_forward.1']
    #allocation4 [shape = 's32[1]{0}', space=sflag, size = 0x4, scoped, tag = 'scoped memory for net_forward.1']
    #allocation5 [shape = 'u8[4096]{0}', space=vmem, size = 0x1000, scoped, tag = 'input window, operand 1, single buffered']
    #allocation6 [shape = 's32[1]{0}', space=sflag, size = 0x4, scoped, tag = 'scoped memory for net_forward.1']
    #allocation7 [shape = 'u8[512]{0}', space=vmem, size = 0x400, scoped, tag = 'output window, operand 0, single buffered']
    %7 = vsyncpa [#allocation3], 0
    %8 = vsyncpa [#allocation6], 0
    %9 = vsyncpa [#allocation4], 0
    // Predicated region
    $region2: #{net_forward.1} parent=1 // pred_check
      _
    $region3: #{net_forward.1} parent=1 // pred_check_branch
      %11 = sbr.rel (0) target = $region5
    $region4: #{net_forward.1} parent=1 // pred_region
      %13 = vsyncadd [#allocation3], 0
      %s15 = sshll.u32 %s0, 4
      %s16 = int_to_ptr.hbm [resolvable:$true] %s15
      %s17 = sshll.u32 [#allocation2], 4
      %s18 = int_to_ptr.vmem [resolvable:$true] %s17
      %20 = dma.hbm_to_vmem [thread:$0]  %s16, 64, %s18, [#allocation3]
    $region5: #{net_forward.1} parent=1 // pred_fallthru
      _
    // Predicated region
    $region6: #{net_forward.1} parent=1 // pred_check
      _
    $region7: #{net_forward.1} parent=1 // pred_check_branch
      %22 = sbr.rel (0) target = $region9
    $region8: #{net_forward.1} parent=1 // pred_region
      %24 = vsyncadd [#allocation6], 0
      %s26 = sshll.u32 %s1, 4
      %s27 = int_to_ptr.hbm [resolvable:$true] %s26
      %s28 = sshll.u32 [#allocation5], 4
      %s29 = int_to_ptr.vmem [resolvable:$true] %s28
      %31 = dma.hbm_to_vmem [thread:$0]  %s27, 128, %s29, [#allocation6]
    $region9: #{net_forward.1} parent=1 // pred_fallthru
      _
    // Predicated region
    $region10: #{net_forward.1} parent=1 // pred_check
      _
    $region11: #{net_forward.1} parent=1 // pred_check_branch
      %33 = sbr.rel (0) target = $region13
    $region12: #{net_forward.1} parent=1 // pred_region
      %35 = dma.done [#allocation3], 64
    $region13: #{net_forward.1} parent=1 // pred_fallthru
      _
    // Predicated region
    $region14: #{net_forward.1} parent=1 // pred_check
      _
    $region15: #{net_forward.1} parent=1 // pred_check_branch
      %37 = sbr.rel (0) target = $region17
    $region16: #{net_forward.1} parent=1 // pred_region
      %39 = dma.done [#allocation6], 128
    $region17: #{net_forward.1} parent=1 // pred_fallthru
      _
    %v40 = vld [vmem:[#allocation2] sm:$0xf]
    %v41 = vld [vmem:[#allocation5] sm:$0xff]
    %43 = vset.pattern.permute.xlu0 0
    %44 = vperm.xlu0 %43, %v41
    %v45 = vpop.permute.xlu0 %44
    %v47 = vperm.slane %v40, 0
    %v48 = vmul.f32 %v45, %v47
    %49 = vset.pattern.permute.xlu0 4
    %50 = vperm.xlu0 %49, %v41
    %v51 = vpop.permute.xlu0 %50
    %v53 = vadd.f32 %v51, %v48
    %54 = vset.pattern.permute.xlu0 1
    %55 = vperm.xlu0 %54, %v41
    %v56 = vpop.permute.xlu0 %55
    %v58 = vperm.slane %v40, 1
    %v59 = vmul.f32 %v56, %v58
    %v60 = vadd.f32 %v53, %v59
    %61 = vset.pattern.permute.xlu0 2
    %62 = vperm.xlu0 %61, %v41
    %v63 = vpop.permute.xlu0 %62
    %v65 = vperm.slane %v40, 2
    %v66 = vmul.f32 %v63, %v65
    %v67 = vadd.f32 %v60, %v66
    %68 = vset.pattern.permute.xlu0 3
    %69 = vperm.xlu0 %68, %v41
    %v70 = vpop.permute.xlu0 %69
    %v72 = vperm.slane %v40, 3
    %v73 = vmul.f32 %v70, %v72
    %v74 = vadd.f32 %v67, %v73
    %v75 = vmax.f32 %v74, 0.0
    %v77 = vrot.slane %v75, 4
    %v79 = vmul.f32 %v45, %v77
    %v80 = vadd.f32 %v51, %v79
    %v81 = vrot.slane %v75, 5
    %v83 = vmul.f32 %v56, %v81
    %v84 = vadd.f32 %v80, %v83
    %v85 = vrot.slane %v75, 6
    %v87 = vmul.f32 %v63, %v85
    %v88 = vadd.f32 %v84, %v87
    %v89 = vrot.slane %v75, 7
    %v91 = vmul.f32 %v70, %v89
    %v92 = vadd.f32 %v88, %v91
    %vm93 = vcmask 61444
    %94 = vst.msk [vmem:[#allocation7 - $0x4] sm:$0x10] %vm93, %v92
    // Predicated region
    $region18: #{net_forward.1} parent=1 // pred_check
      _
    $region19: #{net_forward.1} parent=1 // pred_check_branch
      %96 = sbr.rel (0) target = $region21
    $region20: #{net_forward.1} parent=1 // pred_region
      %98 = vsyncadd [#allocation4], 0
      %s100 = sshll.u32 [#allocation7], 4
      %s101 = int_to_ptr.vmem [resolvable:$true] %s100
      %s102 = sshll.u32 %s2, 4
      %s103 = int_to_ptr.hbm [resolvable:$true] %s102
      %105 = dma.vmem_to_hbm [thread:$0]  %s101, 16, %s103, [#allocation4]
    $region21: #{net_forward.1} parent=1 // pred_fallthru
      _
    // Predicated region
    $region22: #{net_forward.1} parent=1 // pred_check
      _
    $region23: #{net_forward.1} parent=1 // pred_check_branch
      %107 = sbr.rel (0) target = $region25
    $region24: #{net_forward.1} parent=1 // pred_region
      %109 = dma.done [#allocation4], 16
    $region25: #{net_forward.1} parent=1 // pred_fallthru
      _
    %110 = vsyncpa [#allocation3], 1
    %111 = vsyncpa [#allocation6], 1
    %112 = vsyncpa [#allocation4], 1

</llo_original>
